<compile_context>
chip_gen: v7x
topology: tpu7x:2x2x1
jax: 0.10.0
libtpu: 0.0.40
codegen_flags: <defaults>
</compile_context>

<pallas_src>
import functools

import jax
import jax.numpy as jnp
from jax.experimental import pallas as pl
from jax.experimental.pallas import tpu as pltpu

_MIB = 1 << 20


def _sublane(dtype) -> int:
    """Sublane packing granule: 8 for 4-byte dtypes, 16 for 2-byte, 32 for 1."""
    return max(8, 32 // jnp.dtype(dtype).itemsize)


def _vmem_capacity_bytes() -> int:
    """Physical VMEM per TensorCore; conservative 64 MiB if the query fails."""
    try:
        cap = getattr(pltpu.get_tpu_info(), "vmem_capacity_bytes", None)
        if cap:
            return int(cap)
    except Exception:
        pass
    return 64 * _MIB  # v7x-sized fallback; safe on every generation


def _select_tiles(B, N, F, adj_b, feat_b, out_b, budget, feat_buffers, sub):
    """Pick (TB, TM, vmem_need).

    TM: largest candidate (up to 512, or full N) whose working set fits the
    VMEM budget.  TB: smallest divisor of B that brings the adjacency block up
    to >= ~1 MiB per DMA (small-graph case), still within budget.
    """
    def usage(tb, tm):
        return (2 * tb * tm * N * adj_b               # adj, double buffered
                + feat_buffers * tb * N * F * feat_b  # resident feature block
                + 2 * tb * tm * F * out_b             # out, double buffered
                + 2 * tb * tm * F * 4)                # f32 accumulator + temps

    cands = {c for c in (512, 256, 128, 64, 32, 16, 8)
             if N % c == 0 and c >= sub}
    if N <= 512:
        cands.add(N)
    tm = next((c for c in sorted(cands, reverse=True)
               if usage(1, c) <= budget), None)
    if tm is None:
        # TODO(synk): tile F with a third grid axis instead of erroring.
        raise ValueError(
            "mean_aggregator: the (N, F) feature block does not fit the VMEM "
            f"budget ({budget} bytes) even at the smallest row tile; "
            "F-tiling is not implemented.")

    tb, target = 1, 1 * _MIB  # aim for >= ~1 MiB adjacency DMA per grid step
    for d in sorted(d for d in range(1, B + 1) if B % d == 0):
        if usage(d, tm) > budget:
            break
        tb = d
        if d * tm * N * adj_b >= target:
            break
    return tb, tm, usage(tb, tm)


def _mean_agg_kernel(adj_ref, feat_ref, out_ref, *, add_self: bool, tm: int):
    adj = adj_ref[...]    # (TB, TM, N), native dtype
    feat = feat_ref[...]  # (TB, N, F),  native dtype

    # Unnormalized neighbor aggregation on the MXU, f32 accumulation.
    acc = jnp.einsum("bmn,bnf->bmf", adj, feat,
                     preferred_element_type=jnp.float32)          # (TB, TM, F)

    # Row degree, exact in f32.  f32 adjacency: plain row-sum (no cast temp).
    # Narrower dtypes: MXU dot with a ones column so we never materialize an
    # f32 copy of the adjacency tile and accumulation stays integer-exact.
    if adj.dtype == jnp.float32:
        deg = jnp.sum(adj, axis=-1, keepdims=True)                # (TB, TM, 1)
    else:
        ones_col = jnp.ones((adj.shape[0], adj.shape[2], 1), adj.dtype)
        deg = jnp.einsum("bmn,bnk->bmk", adj, ones_col,
                         preferred_element_type=jnp.float32)      # (TB, TM, 1)

    if add_self:
        # Implicit self loop: + own feature rows for this tile, +1 degree.
        if tm == feat_ref.shape[1]:
            self_feat = feat
        else:
            row0 = pl.multiple_of(pl.program_id(1) * tm, tm)
            self_feat = feat_ref[:, pl.ds(row0, tm), :]           # (TB, TM, F)
        acc = acc + self_feat.astype(jnp.float32)
        deg = deg + 1.0

    # Normalize after the matmul; zero-degree rows -> 0 (matches the torch
    # 0/0 -> NaN -> 0 path for non-negative adjacencies).
    inv = jnp.where(deg == 0.0, jnp.zeros_like(deg), 1.0 / deg)
    out_ref[...] = (acc * inv).astype(out_ref.dtype)


def _build_call(B, N, F, TB, TM, out_dtype, add_self, single_buffer_feat,
                vmem_limit, cost):
    kernel = functools.partial(_mean_agg_kernel, add_self=add_self, tm=TM)
    feat_kwargs = {}
    if single_buffer_feat:
        # The feature block index is constant along the row-tile axis; a
        # single buffer saves N*F*itemsize of VMEM (double buffering would
        # only hide one DMA per batch-tile transition).
        feat_kwargs["pipeline_mode"] = pl.Buffered(1)
    return pl.pallas_call(
        kernel,
        out_shape=jax.ShapeDtypeStruct((B, N, F), out_dtype),
        grid_spec=pltpu.PrefetchScalarGridSpec(
            num_scalar_prefetch=0,
            grid=(B // TB, N // TM),
            in_specs=[
                # Adjacency batch/row tile (batch tiling keeps these DMAs
                # >= ~1 MiB for small graphs, so 2-deep pipelining suffices).
                pl.BlockSpec((TB, TM, N), lambda b, i: (b, i, 0)),
                # Feature block, resident across the row-tile axis.
                pl.BlockSpec((TB, N, F), lambda b, i: (b, 0, 0), **feat_kwargs),
            ],
            out_specs=pl.BlockSpec((TB, TM, F), lambda b, i: (b, i, 0)),
        ),
        compiler_params=pltpu.CompilerParams(
            # Both axes write disjoint output blocks -> megacore shardable.
            # (v7x note: with B == 1 the row axis is what splits across the 2
            #  TensorCores and each core fetches its own copy of the feature
            #  block -- second order, adjacency traffic dominates.)
            dimension_semantics=("parallel", "parallel"),
            vmem_limit_bytes=vmem_limit,
        ),
        cost_estimate=cost,
    )


def mean_aggregator(node_features, nodes, adj_list, *, add_self: bool,
                    sample_num: int = 0):
    """Pallas implementation of Mean_aggregator.forward.

    node_features: [B, N, F]; adj_list: [B, N, N]; returns [B, N, F].
    `nodes` / `sample_num` are unused by the reference forward (kept for
    signature parity).

    API contract: adjacency weights are expected to be non-negative.  Rows
    summing to zero produce 0 (torch's 0/0 -> NaN -> 0 path); signed rows
    summing to *exactly* zero would give +/-inf in torch but 0 here.  Passing
    the adjacency in bf16 straight from its producer (no wrapper cast) halves
    HBM traffic, which is this op's bottleneck.
    """
    del nodes, sample_num  # unused in the reference forward
    B, N, F = node_features.shape
    assert adj_list.shape == (B, N, N), (adj_list.shape, (B, N, N))
    out_dtype = node_features.dtype

    # Pad N up to the sublane granule so rows can always be tiled (never an
    # O(N^2) adjacency block).  Exact: padded rows have zero degree -> zero
    # output (sliced off); padded columns / feature rows contribute nothing.
    sub = max(_sublane(adj_list.dtype), _sublane(node_features.dtype))
    n_pad = ((N + sub - 1) // sub) * sub
    adj_p, feat_p = adj_list, node_features
    if n_pad != N:
        dp = n_pad - N
        adj_p = jnp.pad(adj_list, ((0, 0), (0, dp), (0, dp)))
        feat_p = jnp.pad(node_features, ((0, 0), (0, dp), (0, 0)))

    adj_b = adj_p.dtype.itemsize
    feat_b = feat_p.dtype.itemsize
    out_b = jnp.dtype(out_dtype).itemsize

    # Per-generation VMEM budget: capacity minus headroom for Mosaic internal
    # scratch (~56 MiB usable on v7x's 64 MiB, ~112 MiB on v5e/v6e's 128 MiB).
    vmem_cap = _vmem_capacity_bytes()
    budget = vmem_cap - max(8 * _MIB, vmem_cap // 8)

    cost = pl.CostEstimate(
        flops=2 * B * n_pad * n_pad * F,
        transcendentals=0,
        bytes_accessed=(adj_p.size * adj_b + feat_p.size * feat_b
                        + B * n_pad * F * out_b),
    )

    out_p, last_err = None, None
    for feat_buffers in (1, 2):  # 1 => single-buffered feature block
        tb, tm, vmem_need = _select_tiles(
            B, n_pad, F, adj_b, feat_b, out_b, budget, feat_buffers, sub)
        vmem_limit = int(min(vmem_cap - 4 * _MIB,
                             max(vmem_need + 8 * _MIB, 32 * _MIB)))
        call = _build_call(B, n_pad, F, tb, tm, out_dtype, add_self,
                           single_buffer_feat=(feat_buffers == 1),
                           vmem_limit=vmem_limit, cost=cost)
        try:
            out_p = jax.block_until_ready(call(adj_p, feat_p))
            break
        except Exception as err:  # pl.Buffered(1) unsupported -> re-budget
            last_err = err
            out_p = None
    if out_p is None:
        raise last_err

    return out_p if n_pad == N else out_p[:, :N, :]


def _reference(node_features, adj_list, add_self):
    """Pure-JAX replica of the torch forward (f32, highest precision)."""
    adj = adj_list.astype(jnp.float32)
    feat = node_features.astype(jnp.float32)
    if add_self:
        adj = adj + jnp.eye(adj.shape[-1], dtype=adj.dtype)[None]
    s = adj.sum(-1, keepdims=True)
    mask = adj / s
    mask = jnp.where(jnp.isnan(mask), jnp.zeros_like(mask), mask)
    return jnp.einsum("bij,bjf->bif", mask, feat,
                      precision=jax.lax.Precision.HIGHEST)


if __name__ == "__main__":
    key = jax.random.PRNGKey(0)

    # (B, N, F, dtype, tolerance)
    cases = [
        (2, 16, 32, jnp.float32, 1e-3),     # tiny graph, single-step grid
        (3, 20, 48, jnp.float32, 1e-3),     # N not a multiple of 8 (padding)
        (2, 128, 128, jnp.float32, 1e-3),   # lane-dense, batch-tiled
        (2, 128, 128, jnp.bfloat16, 2e-2),  # native bf16 inputs / MXU degree
        (2, 640, 64, jnp.float32, 1e-3),    # multiple row tiles (TM < N)
        (8, 512, 64, jnp.float32, 1e-3),    # multiple batch blocks (pipeline)
    ]

    for (B, N, F, dtype, tol) in cases:
        key, k_feat, k_adj = jax.random.split(key, 3)
        feat = jax.random.normal(k_feat, (B, N, F), dtype=jnp.float32)
        # Random 0/1 adjacency with an all-zero row to exercise the
        # zero-degree (torch 0/0 -> NaN -> 0) path.
        adj = (jax.random.uniform(k_adj, (B, N, N)) > 0.5).astype(jnp.float32)
        adj = adj.at[0, 3, :].set(0.0)
        feat = feat.astype(dtype)
        adj = adj.astype(dtype)
        nodes = jnp.arange(N)  # unused by forward, kept for signature parity

        for add_self in (False, True):
            out = mean_aggregator(feat, nodes, adj,
                                  add_self=add_self, sample_num=5)
            out = jax.block_until_ready(out)
            ref = _reference(feat, adj, add_self)
            assert out.shape == (B, N, F), out.shape
            ok = jnp.allclose(out.astype(jnp.float32), ref, atol=tol, rtol=tol)
            assert ok, f"mismatch dtype={dtype} N={N} add_self={add_self}"

    print("KERNEL_OK")
</pallas_src>

<mosaic_0001>
module attributes {stable_mosaic.version = 11 : i64} {
  func.func @_mean_agg_kernel(%arg0: i32, %arg1: i32, %arg2: memref<2x16x16xf32, #tpu.memory_space<vmem>>, %arg3: memref<2x16x32xf32, #tpu.memory_space<vmem>>, %arg4: memref<2x16x32xf32, #tpu.memory_space<vmem>>) attributes {dimension_semantics = [#tpu.dimension_semantics<parallel>, #tpu.dimension_semantics<parallel>], iteration_bounds = array<i64: 1, 1>, scalar_prefetch = 0 : i64, scratch_operands = 0 : i64, tpu.core_type = #tpu.core_type<tc>, window_params = [{transform_indices = @transform_0, window_bounds = array<i64: 2, 16, 16>}, {pipeline_mode = #tpu.pipeline_mode<synchronous>, transform_indices = @transform_1, window_bounds = array<i64: 2, 16, 32>}, {transform_indices = @transform_2, window_bounds = array<i64: 2, 16, 32>}]} {
    %c0 = arith.constant 0 : index
    %c0_0 = arith.constant 0 : index
    %c0_1 = arith.constant 0 : index
    %0 = vector.load %arg2[%c0, %c0_0, %c0_1] : memref<2x16x16xf32, #tpu.memory_space<vmem>>, vector<2x16x16xf32>
    %c0_2 = arith.constant 0 : index
    %c0_3 = arith.constant 0 : index
    %c0_4 = arith.constant 0 : index
    %1 = vector.load %arg3[%c0_2, %c0_3, %c0_4] : memref<2x16x32xf32, #tpu.memory_space<vmem>>, vector<2x16x32xf32>
    "tpu.trace_start"() <{level = 10 : i32, message = "bmn,bnf->bmf"}> : () -> ()
    %cst = arith.constant dense<0.000000e+00> : vector<2x16x32xf32>
    %2 = tpu.matmul %0, %1, %cst {dimension_numbers = #tpu.dot_dimension_numbers<[2], [1], [1], [2], [0, 0, 0, 1, 1, 2], [0], [0]>} : vector<2x16x16xf32>, vector<2x16x32xf32>, vector<2x16x32xf32> -> vector<2x16x32xf32>
    "tpu.trace_stop"() : () -> ()
    %cst_5 = arith.constant dense<0.000000e+00> : vector<2x16xf32>
    %3 = vector.multi_reduction <add>, %0, %cst_5 [2] : vector<2x16x16xf32> to vector<2x16xf32>
    %4 = vector.shape_cast %3 : vector<2x16xf32> to vector<2x16x1xf32>
    %cst_6 = arith.constant 0.000000e+00 : f32
    %5 = vector.broadcast %cst_6 : f32 to vector<2x16x1xf32>
    %6 = arith.cmpf oeq, %4, %5 : vector<2x16x1xf32>
    %cst_7 = arith.constant 0.000000e+00 : f32
    %7 = vector.broadcast %cst_7 : f32 to vector<2x16x1xf32>
    %cst_8 = arith.constant 1.000000e+00 : f32
    %8 = vector.broadcast %cst_8 : f32 to vector<2x16x1xf32>
    %9 = arith.divf %8, %4 : vector<2x16x1xf32>
    %10 = arith.select %6, %7, %9 : vector<2x16x1xi1>, vector<2x16x1xf32>
    %11 = vector.broadcast %10 : vector<2x16x1xf32> to vector<2x16x32xf32>
    %12 = arith.mulf %2, %11 : vector<2x16x32xf32>
    %c0_9 = arith.constant 0 : index
    %c0_10 = arith.constant 0 : index
    %c0_11 = arith.constant 0 : index
    %13 = vector.load %arg4[%c0_9, %c0_10, %c0_11] : memref<2x16x32xf32, #tpu.memory_space<vmem>>, vector<2x16x32xf32>
    tpu.vector_store %arg4[%c0_9, %c0_10, %c0_11], %12 {strides = array<i32>} : memref<2x16x32xf32, #tpu.memory_space<vmem>>, vector<2x16x32xf32>,
    return
  }
  func.func @transform_0(%arg0: i32, %arg1: i32) -> (i32, i32, i32) {
    %c0_i32 = arith.constant 0 : i32
    %c0_i32_0 = arith.constant 0 : i32
    return %arg0, %arg1, %c0_i32 : i32, i32, i32
  }
  func.func @transform_1(%arg0: i32, %arg1: i32) -> (i32, i32, i32) {
    %c0_i32 = arith.constant 0 : i32
    %c0_i32_0 = arith.constant 0 : i32
    %c0_i32_1 = arith.constant 0 : i32
    return %arg0, %c0_i32, %c0_i32_0 : i32, i32, i32
  }
  func.func @transform_2(%arg0: i32, %arg1: i32) -> (i32, i32, i32) {
    %c0_i32 = arith.constant 0 : i32
    %c0_i32_0 = arith.constant 0 : i32
    return %arg0, %arg1, %c0_i32 : i32, i32, i32
  }
}

module attributes {stable_mosaic.version = 11 : i64} {
  func.func @_mean_agg_kernel(%arg0: i32, %arg1: i32, %arg2: memref<2x16x16xf32, #tpu.memory_space<vmem>>, %arg3: memref<2x16x32xf32, #tpu.memory_space<vmem>>, %arg4: memref<2x16x32xf32, #tpu.memory_space<vmem>>) attributes {dimension_semantics = [#tpu.dimension_semantics<parallel>, #tpu.dimension_semantics<parallel>], iteration_bounds = array<i64: 1, 1>, scalar_prefetch = 0 : i64, scratch_operands = 0 : i64, tpu.core_type = #tpu.core_type<tc>, window_params = [{transform_indices = @transform_0, window_bounds = array<i64: 2, 16, 16>}, {transform_indices = @transform_1, window_bounds = array<i64: 2, 16, 32>}, {transform_indices = @transform_2, window_bounds = array<i64: 2, 16, 32>}]} {
    %c0 = arith.constant 0 : index
    %c0_0 = arith.constant 0 : index
    %c0_1 = arith.constant 0 : index
    %0 = vector.load %arg2[%c0, %c0_0, %c0_1] : memref<2x16x16xf32, #tpu.memory_space<vmem>>, vector<2x16x16xf32>
    %c0_2 = arith.constant 0 : index
    %c0_3 = arith.constant 0 : index
    %c0_4 = arith.constant 0 : index
    %1 = vector.load %arg3[%c0_2, %c0_3, %c0_4] : memref<2x16x32xf32, #tpu.memory_space<vmem>>, vector<2x16x32xf32>
    "tpu.trace_start"() <{level = 10 : i32, message = "bmn,bnf->bmf"}> : () -> ()
    %cst = arith.constant dense<0.000000e+00> : vector<2x16x32xf32>
    %2 = tpu.matmul %0, %1, %cst {dimension_numbers = #tpu.dot_dimension_numbers<[2], [1], [1], [2], [0, 0, 0, 1, 1, 2], [0], [0]>} : vector<2x16x16xf32>, vector<2x16x32xf32>, vector<2x16x32xf32> -> vector<2x16x32xf32>
    "tpu.trace_stop"() : () -> ()
    %cst_5 = arith.constant dense<0.000000e+00> : vector<2x16xf32>
    %3 = vector.multi_reduction <add>, %0, %cst_5 [2] : vector<2x16x16xf32> to vector<2x16xf32>
    %4 = vector.shape_cast %3 : vector<2x16xf32> to vector<2x16x1xf32>
    %cst_6 = arith.constant 0.000000e+00 : f32
    %5 = vector.broadcast %cst_6 : f32 to vector<2x16x1xf32>
    %6 = arith.cmpf oeq, %4, %5 : vector<2x16x1xf32>
    %cst_7 = arith.constant 0.000000e+00 : f32
    %7 = vector.broadcast %cst_7 : f32 to vector<2x16x1xf32>
    %cst_8 = arith.constant 1.000000e+00 : f32
    %8 = vector.broadcast %cst_8 : f32 to vector<2x16x1xf32>
    %9 = arith.divf %8, %4 : vector<2x16x1xf32>
    %10 = arith.select %6, %7, %9 : vector<2x16x1xi1>, vector<2x16x1xf32>
    %11 = vector.broadcast %10 : vector<2x16x1xf32> to vector<2x16x32xf32>
    %12 = arith.mulf %2, %11 : vector<2x16x32xf32>
    %c0_9 = arith.constant 0 : index
    %c0_10 = arith.constant 0 : index
    %c0_11 = arith.constant 0 : index
    %13 = vector.load %arg4[%c0_9, %c0_10, %c0_11] : memref<2x16x32xf32, #tpu.memory_space<vmem>>, vector<2x16x32xf32>
    tpu.vector_store %arg4[%c0_9, %c0_10, %c0_11], %12 {strides = array<i32>} : memref<2x16x32xf32, #tpu.memory_space<vmem>>, vector<2x16x32xf32>,
    return
  }
  func.func @transform_0(%arg0: i32, %arg1: i32) -> (i32, i32, i32) {
    %c0_i32 = arith.constant 0 : i32
    %c0_i32_0 = arith.constant 0 : i32
    return %arg0, %arg1, %c0_i32 : i32, i32, i32
  }
  func.func @transform_1(%arg0: i32, %arg1: i32) -> (i32, i32, i32) {
    %c0_i32 = arith.constant 0 : i32
    %c0_i32_0 = arith.constant 0 : i32
    %c0_i32_1 = arith.constant 0 : i32
    return %arg0, %c0_i32, %c0_i32_0 : i32, i32, i32
  }
  func.func @transform_2(%arg0: i32, %arg1: i32) -> (i32, i32, i32) {
    %c0_i32 = arith.constant 0 : i32
    %c0_i32_0 = arith.constant 0 : i32
    return %arg0, %arg1, %c0_i32 : i32, i32, i32
  }
}

</mosaic_0001>

<llo_original>
// kernel: tpu_custom_call.1
$region0: #{tpu_custom_call.1}
  #allocation0 [shape = 'u32[]', space=smem, size = 0x4, offset = 0x4, fixed_abs, tag = 'smem constant byte address 0x4 - core index']
  #allocation1 [shape = 'u32[144,128]{1,0:T(1,128)}', space=vmem, size = 0x12000, scoped, tag = 'internal scratch']
  %s0 = inlined_call_operand.hbm [shape: f32[2,16,16], index: 0, kind: input, shape index: {}]
  %s1 = inlined_call_operand.hbm [shape: f32[2,16,32], index: 1, kind: input, shape index: {}]
  %s2 = inlined_call_operand.hbm [shape: f32[2,16,32], index: 2, kind: output, shape index: {}]
  %s3 = sld [smem:[#allocation0]]
  $region26: #{tpu_custom_call.1} parent=0
    _
  %s5 = ssub.s32 1, %s3
  %s6 = scalar_select 0, %s5, %s3
  $region1: #{tpu_custom_call.1} parent=0
    #allocation2 [shape = 'u8[16384]{0}', space=vmem, size = 0x4000, scoped, tag = 'input window, operand 0, single buffered']
    #allocation3 [shape = 's32[1]{0}', space=sflag, size = 0x4, scoped, tag = 'scoped memory for tpu_custom_call.1']
    #allocation4 [shape = 's32[1]{0}', space=sflag, size = 0x4, scoped, tag = 'scoped memory for tpu_custom_call.1']
    #allocation5 [shape = 'u8[16384]{0}', space=vmem, size = 0x4000, scoped, tag = 'input window, operand 1, single buffered']
    #allocation6 [shape = 's32[1]{0}', space=sflag, size = 0x4, scoped, tag = 'scoped memory for tpu_custom_call.1']
    #allocation7 [shape = 'u8[16384]{0}', space=vmem, size = 0x4000, scoped, tag = 'output window, operand 0, single buffered']
    %7 = vsyncpa [#allocation3], 0
    %8 = vsyncpa [#allocation6], 0
    %9 = vsyncpa [#allocation4], 0
    // Predicated region
    $region2: #{tpu_custom_call.1} parent=1 // pred_check
      _
    $region3: #{tpu_custom_call.1} parent=1 // pred_check_branch
      %11 = sbr.rel (0) target = $region5
    $region4: #{tpu_custom_call.1} parent=1 // pred_region
      %s13 = ssub.s32 512, 512
      %14 = vsyncadd [#allocation3], %s13
      %s15 = sshll.u32 [#allocation2], 4
      %s16 = int_to_ptr.vmem [resolvable:$true] %s15
      %21 = dma.hbm_to_vmem [thread:$0]  %s0, 512, %s16, [#allocation3], 128, 128, 8
    $region5: #{tpu_custom_call.1} parent=1 // pred_fallthru
      _
    // Predicated region
    $region6: #{tpu_custom_call.1} parent=1 // pred_check
      _
    $region7: #{tpu_custom_call.1} parent=1 // pred_check_branch
      %23 = sbr.rel (0) target = $region9
    $region8: #{tpu_custom_call.1} parent=1 // pred_region
      %s25 = ssub.s32 512, 512
      %26 = vsyncadd [#allocation6], %s25
      %s27 = sshll.u32 [#allocation5], 4
      %s28 = int_to_ptr.vmem [resolvable:$true] %s27
      %33 = dma.hbm_to_vmem [thread:$0]  %s1, 512, %s28, [#allocation6], 128, 128, 8
    $region9: #{tpu_custom_call.1} parent=1 // pred_fallthru
      _
    // Predicated region
    $region10: #{tpu_custom_call.1} parent=1 // pred_check
      _
    $region11: #{tpu_custom_call.1} parent=1 // pred_check_branch
      %35 = sbr.rel (0) target = $region13
    $region12: #{tpu_custom_call.1} parent=1 // pred_region
      %36 = dma.done [#allocation3], 512
    $region13: #{tpu_custom_call.1} parent=1 // pred_fallthru
      _
    // Predicated region
    $region14: #{tpu_custom_call.1} parent=1 // pred_check
      _
    $region15: #{tpu_custom_call.1} parent=1 // pred_check_branch
      %38 = sbr.rel (0) target = $region17
    $region16: #{tpu_custom_call.1} parent=1 // pred_region
      %39 = dma.done [#allocation6], 512
    $region17: #{tpu_custom_call.1} parent=1 // pred_fallthru
      _
    %v40 = vld [vmem:[#allocation2] sm:$0xff]
    %v41 = vld [vmem:[#allocation2 + $0x8] sm:$0xff]
    %v42 = vld [vmem:[#allocation2 + $0x10] sm:$0xff]
    %v43 = vld [vmem:[#allocation2 + $0x18] sm:$0xff]
    %v44 = vld [vmem:[#allocation5] sm:$0xff]
    %v45 = vld [vmem:[#allocation5 + $0x8] sm:$0xff]
    %v46 = vld [vmem:[#allocation5 + $0x10] sm:$0xff]
    %v47 = vld [vmem:[#allocation5 + $0x18] sm:$0xff]
    %vm48 = vcmask 130048
    %v50 = vsel %vm48, %v40, 0
    %v53 = vsel %vm48, %v41, 0
    %55 = vmatprep.subr.mxu0 0.0
    %56 = vmatpush1.msra.mxu0 %v44
    %57 = vmatprep.subr.mxu0 0.0
    %58 = vmatpush1.msra.mxu0 %v45
    %59 = vmatprep.subr.mxu0 0.0
    %60 = vmatpush1.msra.mxu0 0.0
    %61 = vmatprep.subr.mxu0 0.0
    %62 = vmatpush1.msra.mxu0 0.0
    %63 = vmatprep.subr.mxu0 0.0
    %64 = vmatpush1.msra.mxu0 0.0
    %65 = vmatprep.subr.mxu0 0.0
    %66 = vmatpush1.msra.mxu0 0.0
    %67 = vmatprep.subr.mxu0 0.0
    %68 = vmatpush1.msra.mxu0 0.0
    %69 = vmatprep.subr.mxu0 0.0
    %70 = vmatpush1.msra.mxu0 0.0
    %71 = vmatprep.subr.mxu0 0.0
    %72 = vmatpush1.msra.mxu0 0.0
    %73 = vmatprep.subr.mxu0 0.0
    %74 = vmatpush1.msra.mxu0 0.0
    %75 = vmatprep.subr.mxu0 0.0
    %76 = vmatpush1.msra.mxu0 0.0
    %77 = vmatprep.subr.mxu0 0.0
    %78 = vmatpush1.msra.mxu0 0.0
    %79 = vmatprep.subr.mxu0 0.0
    %80 = vmatpush1.msra.mxu0 0.0
    %81 = vmatprep.subr.mxu0 0.0
    %82 = vmatpush1.msra.mxu0 0.0
    %83 = vmatprep.subr.mxu0 0.0
    %84 = vmatpush1.msra.mxu0 0.0
    %85 = vmatprep.subr.mxu0 0.0
    %86 = vmatpush1.msra.mxu0 0.0
    %87 = vmatprep.subr.mxu0 0.0
    %88 = vmatpush1.msra.mxu0 0.0
    %89 = vmatprep.subr.mxu0 0.0
    %90 = vmatpush1.msra.mxu0 0.0
    %91 = vmatprep.subr.mxu0 0.0
    %92 = vmatpush1.msra.mxu0 0.0
    %93 = vmatprep.subr.mxu0 0.0
    %94 = vmatpush1.msra.mxu0 0.0
    %95 = vmatprep.subr.mxu0 0.0
    %96 = vmatpush1.msra.mxu0 0.0
    %97 = vmatprep.subr.mxu0 0.0
    %98 = vmatpush1.msra.mxu0 0.0
    %99 = vmatprep.subr.mxu0 0.0
    %100 = vmatpush1.msra.mxu0 0.0
    %101 = vmatprep.subr.mxu0 0.0
    %102 = vmatpush1.msra.mxu0 0.0
    %103 = vmatprep.subr.mxu0 0.0
    %104 = vmatpush1.msra.mxu0 0.0
    %105 = vmatprep.subr.mxu0 0.0
    %106 = vmatpush1.msra.mxu0 0.0
    %107 = vmatprep.subr.mxu0 0.0
    %108 = vmatpush1.msra.mxu0 0.0
    %109 = vmatprep.subr.mxu0 0.0
    %110 = vmatpush1.msra.mxu0 0.0
    %111 = vmatprep.subr.mxu0 0.0
    %112 = vmatpush1.msra.mxu0 0.0
    %113 = vmatprep.subr.mxu0 0.0
    %114 = vmatpush1.msra.mxu0 0.0
    %115 = vmatprep.subr.mxu0 0.0
    %116 = vmatpush1.msra.mxu0 0.0
    %117 = vmatprep.subr.mxu0 0.0
    %118 = vmatpush1.msra.mxu0 0.0
    %119 = vmatprep.mubr.f32.mxu0 0.0
    %120 = vmatmul.mubr.f32.gmra.mrb[0].mxu0 %v50
    %v121 = vpop.f32.mrb[0].mxu0
    %v122 = vadd.f32 0.0, %v121
    %v123 = vpop.f32.mrb[0].mxu0
    %124 = vmatprep.mubr.f32.mxu0 0.0
    %125 = vmatmul.mubr.f32.gmra.mrb[0].mxu0 %v53
    %v126 = vpop.f32.mrb[0].mxu0
    %v127 = vadd.f32 0.0, %v126
    %v128 = vpop.f32.mrb[0].mxu0
    %129 = vdwg.mxu0
    %v131 = vsel %vm48, %v42, 0
    %v134 = vsel %vm48, %v43, 0
    %136 = vmatprep.subr.mxu0 0.0
    %137 = vmatpush1.msra.mxu0 %v46
    %138 = vmatprep.subr.mxu0 0.0
    %139 = vmatpush1.msra.mxu0 %v47
    %140 = vmatprep.subr.mxu0 0.0
    %141 = vmatpush1.msra.mxu0 0.0
    %142 = vmatprep.subr.mxu0 0.0
    %143 = vmatpush1.msra.mxu0 0.0
    %144 = vmatprep.subr.mxu0 0.0
    %145 = vmatpush1.msra.mxu0 0.0
    %146 = vmatprep.subr.mxu0 0.0
    %147 = vmatpush1.msra.mxu0 0.0
    %148 = vmatprep.subr.mxu0 0.0
    %149 = vmatpush1.msra.mxu0 0.0
    %150 = vmatprep.subr.mxu0 0.0
    %151 = vmatpush1.msra.mxu0 0.0
    %152 = vmatprep.subr.mxu0 0.0
    %153 = vmatpush1.msra.mxu0 0.0
    %154 = vmatprep.subr.mxu0 0.0
    %155 = vmatpush1.msra.mxu0 0.0
    %156 = vmatprep.subr.mxu0 0.0
    %157 = vmatpush1.msra.mxu0 0.0
    %158 = vmatprep.subr.mxu0 0.0
    %159 = vmatpush1.msra.mxu0 0.0
    %160 = vmatprep.subr.mxu0 0.0
    %161 = vmatpush1.msra.mxu0 0.0
    %162 = vmatprep.subr.mxu0 0.0
    %163 = vmatpush1.msra.mxu0 0.0
    %164 = vmatprep.subr.mxu0 0.0
    %165 = vmatpush1.msra.mxu0 0.0
    %166 = vmatprep.subr.mxu0 0.0
    %167 = vmatpush1.msra.mxu0 0.0
    %168 = vmatprep.subr.mxu0 0.0
    %169 = vmatpush1.msra.mxu0 0.0
    %170 = vmatprep.subr.mxu0 0.0
    %171 = vmatpush1.msra.mxu0 0.0
    %172 = vmatprep.subr.mxu0 0.0
    %173 = vmatpush1.msra.mxu0 0.0
    %174 = vmatprep.subr.mxu0 0.0
    %175 = vmatpush1.msra.mxu0 0.0
    %176 = vmatprep.subr.mxu0 0.0
    %177 = vmatpush1.msra.mxu0 0.0
    %178 = vmatprep.subr.mxu0 0.0
    %179 = vmatpush1.msra.mxu0 0.0
    %180 = vmatprep.subr.mxu0 0.0
    %181 = vmatpush1.msra.mxu0 0.0
    %182 = vmatprep.subr.mxu0 0.0
    %183 = vmatpush1.msra.mxu0 0.0
    %184 = vmatprep.subr.mxu0 0.0
    %185 = vmatpush1.msra.mxu0 0.0
    %186 = vmatprep.subr.mxu0 0.0
    %187 = vmatpush1.msra.mxu0 0.0
    %188 = vmatprep.subr.mxu0 0.0
    %189 = vmatpush1.msra.mxu0 0.0
    %190 = vmatprep.subr.mxu0 0.0
    %191 = vmatpush1.msra.mxu0 0.0
    %192 = vmatprep.subr.mxu0 0.0
    %193 = vmatpush1.msra.mxu0 0.0
    %194 = vmatprep.subr.mxu0 0.0
    %195 = vmatpush1.msra.mxu0 0.0
    %196 = vmatprep.subr.mxu0 0.0
    %197 = vmatpush1.msra.mxu0 0.0
    %198 = vmatprep.subr.mxu0 0.0
    %199 = vmatpush1.msra.mxu0 0.0
    %200 = vmatprep.mubr.f32.mxu0 0.0
    %201 = vmatmul.mubr.f32.gmra.mrb[0].mxu0 %v131
    %v202 = vpop.f32.mrb[0].mxu0
    %v203 = vadd.f32 0.0, %v202
    %v204 = vpop.f32.mrb[0].mxu0
    %205 = vmatprep.mubr.f32.mxu0 0.0
    %206 = vmatmul.mubr.f32.gmra.mrb[0].mxu0 %v134
    %v207 = vpop.f32.mrb[0].mxu0
    %v208 = vadd.f32 0.0, %v207
    %v209 = vpop.f32.mrb[0].mxu0
    %210 = vdwg.mxu0
    %v211 = vsel %vm48, %v40, 0.0
    %212 = vadd.xlane.f32.xlu0 %v211
    %v213 = vpop.xlane.xlu0 %212
    %v214 = vsel %vm48, %v41, 0.0
    %215 = vadd.xlane.f32.xlu0 %v214
    %v216 = vpop.xlane.xlu0 %215
    %v217 = vsel %vm48, %v42, 0.0
    %218 = vadd.xlane.f32.xlu0 %v217
    %v219 = vpop.xlane.xlu0 %218
    %v220 = vsel %vm48, %v43, 0.0
    %221 = vadd.xlane.f32.xlu0 %v220
    %v222 = vpop.xlane.xlu0 %221
    %vm223 = vcmp.eq.f32.partialorder %v213, 0.0
    %vm224 = vcmp.eq.f32.partialorder %v216, 0.0
    %vm225 = vcmp.eq.f32.partialorder %v219, 0.0
    %vm226 = vcmp.eq.f32.partialorder %v222, 0.0
    %v227 = vrcp.pop %v213
    %v228 = vmul.f32 1.0, %v227
    %v229 = vrcp.pop %v216
    %v230 = vmul.f32 1.0, %v229
    %v231 = vrcp.pop %v219
    %v232 = vmul.f32 1.0, %v231
    %v233 = vrcp.pop %v222
    %v234 = vmul.f32 1.0, %v233
    %v235 = vsel %vm223, 0.0, %v228
    %v236 = vsel %vm224, 0.0, %v230
    %v237 = vsel %vm225, 0.0, %v232
    %v238 = vsel %vm226, 0.0, %v234
    %v239 = vmul.f32 %v122, %v235
    %v240 = vmul.f32 %v127, %v236
    %v241 = vmul.f32 %v203, %v237
    %v242 = vmul.f32 %v208, %v238
    %vm243 = vcmask 261120
    %244 = vst.msk [vmem:[#allocation7] sm:$0xff] %vm243, %v239
    %245 = vst.msk [vmem:[#allocation7 + $0x8] sm:$0xff] %vm243, %v240
    %246 = vst.msk [vmem:[#allocation7 + $0x10] sm:$0xff] %vm243, %v241
    %247 = vst.msk [vmem:[#allocation7 + $0x18] sm:$0xff] %vm243, %v242
    // Predicated region
    $region18: #{tpu_custom_call.1} parent=1 // pred_check
      _
    $region19: #{tpu_custom_call.1} parent=1 // pred_check_branch
      %249 = sbr.rel (0) target = $region21
    $region20: #{tpu_custom_call.1} parent=1 // pred_region
      %s251 = ssub.s32 512, 512
      %252 = vsyncadd [#allocation4], %s251
      %s253 = sshll.u32 [#allocation7], 4
      %s254 = int_to_ptr.vmem [resolvable:$true] %s253
      %259 = dma.vmem_to_hbm [thread:$0]  %s254, 512, %s2, [#allocation4], 128, 128, 8
    $region21: #{tpu_custom_call.1} parent=1 // pred_fallthru
      _
    // Predicated region
    $region22: #{tpu_custom_call.1} parent=1 // pred_check
      _
    $region23: #{tpu_custom_call.1} parent=1 // pred_check_branch
      %261 = sbr.rel (0) target = $region25
    $region24: #{tpu_custom_call.1} parent=1 // pred_region
      %262 = dma.done [#allocation4], 512
    $region25: #{tpu_custom_call.1} parent=1 // pred_fallthru
      _
    %263 = vsyncpa [#allocation3], 1
    %264 = vsyncpa [#allocation6], 1
    %265 = vsyncpa [#allocation4], 1

// kernel: tpu_custom_call.1
$region0: #{tpu_custom_call.1}
  #allocation0 [shape = 'u32[]', space=smem, size = 0x4, offset = 0x4, fixed_abs, tag = 'smem constant byte address 0x4 - core index']
  #allocation1 [shape = 'u32[144,128]{1,0:T(1,128)}', space=vmem, size = 0x12000, scoped, tag = 'internal scratch']
  %s0 = inlined_call_operand.hbm [shape: f32[2,16,16], index: 0, kind: input, shape index: {}]
  %s1 = inlined_call_operand.hbm [shape: f32[2,16,32], index: 1, kind: input, shape index: {}]
  %s2 = inlined_call_operand.hbm [shape: f32[2,16,32], index: 2, kind: output, shape index: {}]
  %s3 = sld [smem:[#allocation0]]
  $region26: #{tpu_custom_call.1} parent=0
    _
  %s5 = ssub.s32 1, %s3
  %s6 = scalar_select 0, %s5, %s3
  $region1: #{tpu_custom_call.1} parent=0
    #allocation2 [shape = 'u8[16384]{0}', space=vmem, size = 0x4000, scoped, tag = 'input window, operand 0, single buffered']
    #allocation3 [shape = 's32[1]{0}', space=sflag, size = 0x4, scoped, tag = 'scoped memory for tpu_custom_call.1']
    #allocation4 [shape = 's32[1]{0}', space=sflag, size = 0x4, scoped, tag = 'scoped memory for tpu_custom_call.1']
    #allocation5 [shape = 'u8[16384]{0}', space=vmem, size = 0x4000, scoped, tag = 'input window, operand 1, single buffered']
    #allocation6 [shape = 's32[1]{0}', space=sflag, size = 0x4, scoped, tag = 'scoped memory for tpu_custom_call.1']
    #allocation7 [shape = 'u8[16384]{0}', space=vmem, size = 0x4000, scoped, tag = 'output window, operand 0, single buffered']
    %7 = vsyncpa [#allocation3], 0
    %8 = vsyncpa [#allocation6], 0
    %9 = vsyncpa [#allocation4], 0
    // Predicated region
    $region2: #{tpu_custom_call.1} parent=1 // pred_check
      _
    $region3: #{tpu_custom_call.1} parent=1 // pred_check_branch
      %11 = sbr.rel (0) target = $region5
    $region4: #{tpu_custom_call.1} parent=1 // pred_region
      %s13 = ssub.s32 512, 512
      %14 = vsyncadd [#allocation3], %s13
      %s15 = sshll.u32 [#allocation2], 4
      %s16 = int_to_ptr.vmem [resolvable:$true] %s15
      %21 = dma.hbm_to_vmem [thread:$0]  %s0, 512, %s16, [#allocation3], 128, 128, 8
    $region5: #{tpu_custom_call.1} parent=1 // pred_fallthru
      _
    // Predicated region
    $region6: #{tpu_custom_call.1} parent=1 // pred_check
      _
    $region7: #{tpu_custom_call.1} parent=1 // pred_check_branch
      %23 = sbr.rel (0) target = $region9
    $region8: #{tpu_custom_call.1} parent=1 // pred_region
      %s25 = ssub.s32 512, 512
      %26 = vsyncadd [#allocation6], %s25
      %s27 = sshll.u32 [#allocation5], 4
      %s28 = int_to_ptr.vmem [resolvable:$true] %s27
      %33 = dma.hbm_to_vmem [thread:$0]  %s1, 512, %s28, [#allocation6], 128, 128, 8
    $region9: #{tpu_custom_call.1} parent=1 // pred_fallthru
      _
    // Predicated region
    $region10: #{tpu_custom_call.1} parent=1 // pred_check
      _
    $region11: #{tpu_custom_call.1} parent=1 // pred_check_branch
      %35 = sbr.rel (0) target = $region13
    $region12: #{tpu_custom_call.1} parent=1 // pred_region
      %36 = dma.done [#allocation3], 512
    $region13: #{tpu_custom_call.1} parent=1 // pred_fallthru
      _
    // Predicated region
    $region14: #{tpu_custom_call.1} parent=1 // pred_check
      _
    $region15: #{tpu_custom_call.1} parent=1 // pred_check_branch
      %38 = sbr.rel (0) target = $region17
    $region16: #{tpu_custom_call.1} parent=1 // pred_region
      %39 = dma.done [#allocation6], 512
    $region17: #{tpu_custom_call.1} parent=1 // pred_fallthru
      _
    %v40 = vld [vmem:[#allocation2] sm:$0xff]
    %v41 = vld [vmem:[#allocation2 + $0x8] sm:$0xff]
    %v42 = vld [vmem:[#allocation2 + $0x10] sm:$0xff]
    %v43 = vld [vmem:[#allocation2 + $0x18] sm:$0xff]
    %v44 = vld [vmem:[#allocation5] sm:$0xff]
    %v45 = vld [vmem:[#allocation5 + $0x8] sm:$0xff]
    %v46 = vld [vmem:[#allocation5 + $0x10] sm:$0xff]
    %v47 = vld [vmem:[#allocation5 + $0x18] sm:$0xff]
    %vm48 = vcmask 130048
    %v50 = vsel %vm48, %v40, 0
    %v53 = vsel %vm48, %v41, 0
    %55 = vmatprep.subr.mxu0 0.0
    %56 = vmatpush1.msra.mxu0 %v44
    %57 = vmatprep.subr.mxu0 0.0
    %58 = vmatpush1.msra.mxu0 %v45
    %59 = vmatprep.subr.mxu0 0.0
    %60 = vmatpush1.msra.mxu0 0.0
    %61 = vmatprep.subr.mxu0 0.0
    %62 = vmatpush1.msra.mxu0 0.0
    %63 = vmatprep.subr.mxu0 0.0
    %64 = vmatpush1.msra.mxu0 0.0
    %65 = vmatprep.subr.mxu0 0.0
    %66 = vmatpush1.msra.mxu0 0.0
    %67 = vmatprep.subr.mxu0 0.0
    %68 = vmatpush1.msra.mxu0 0.0
    %69 = vmatprep.subr.mxu0 0.0
    %70 = vmatpush1.msra.mxu0 0.0
    %71 = vmatprep.subr.mxu0 0.0
    %72 = vmatpush1.msra.mxu0 0.0
    %73 = vmatprep.subr.mxu0 0.0
    %74 = vmatpush1.msra.mxu0 0.0
    %75 = vmatprep.subr.mxu0 0.0
    %76 = vmatpush1.msra.mxu0 0.0
    %77 = vmatprep.subr.mxu0 0.0
    %78 = vmatpush1.msra.mxu0 0.0
    %79 = vmatprep.subr.mxu0 0.0
    %80 = vmatpush1.msra.mxu0 0.0
    %81 = vmatprep.subr.mxu0 0.0
    %82 = vmatpush1.msra.mxu0 0.0
    %83 = vmatprep.subr.mxu0 0.0
    %84 = vmatpush1.msra.mxu0 0.0
    %85 = vmatprep.subr.mxu0 0.0
    %86 = vmatpush1.msra.mxu0 0.0
    %87 = vmatprep.subr.mxu0 0.0
    %88 = vmatpush1.msra.mxu0 0.0
    %89 = vmatprep.subr.mxu0 0.0
    %90 = vmatpush1.msra.mxu0 0.0
    %91 = vmatprep.subr.mxu0 0.0
    %92 = vmatpush1.msra.mxu0 0.0
    %93 = vmatprep.subr.mxu0 0.0
    %94 = vmatpush1.msra.mxu0 0.0
    %95 = vmatprep.subr.mxu0 0.0
    %96 = vmatpush1.msra.mxu0 0.0
    %97 = vmatprep.subr.mxu0 0.0
    %98 = vmatpush1.msra.mxu0 0.0
    %99 = vmatprep.subr.mxu0 0.0
    %100 = vmatpush1.msra.mxu0 0.0
    %101 = vmatprep.subr.mxu0 0.0
    %102 = vmatpush1.msra.mxu0 0.0
    %103 = vmatprep.subr.mxu0 0.0
    %104 = vmatpush1.msra.mxu0 0.0
    %105 = vmatprep.subr.mxu0 0.0
    %106 = vmatpush1.msra.mxu0 0.0
    %107 = vmatprep.subr.mxu0 0.0
    %108 = vmatpush1.msra.mxu0 0.0
    %109 = vmatprep.subr.mxu0 0.0
    %110 = vmatpush1.msra.mxu0 0.0
    %111 = vmatprep.subr.mxu0 0.0
    %112 = vmatpush1.msra.mxu0 0.0
    %113 = vmatprep.subr.mxu0 0.0
    %114 = vmatpush1.msra.mxu0 0.0
    %115 = vmatprep.subr.mxu0 0.0
    %116 = vmatpush1.msra.mxu0 0.0
    %117 = vmatprep.subr.mxu0 0.0
    %118 = vmatpush1.msra.mxu0 0.0
    %119 = vmatprep.mubr.f32.mxu0 0.0
    %120 = vmatmul.mubr.f32.gmra.mrb[0].mxu0 %v50
    %v121 = vpop.f32.mrb[0].mxu0
    %v122 = vadd.f32 0.0, %v121
    %v123 = vpop.f32.mrb[0].mxu0
    %124 = vmatprep.mubr.f32.mxu0 0.0
    %125 = vmatmul.mubr.f32.gmra.mrb[0].mxu0 %v53
    %v126 = vpop.f32.mrb[0].mxu0
    %v127 = vadd.f32 0.0, %v126
    %v128 = vpop.f32.mrb[0].mxu0
    %129 = vdwg.mxu0
    %v131 = vsel %vm48, %v42, 0
    %v134 = vsel %vm48, %v43, 0
    %136 = vmatprep.subr.mxu0 0.0
    %137 = vmatpush1.msra.mxu0 %v46
    %138 = vmatprep.subr.mxu0 0.0
    %139 = vmatpush1.msra.mxu0 %v47
    %140 = vmatprep.subr.mxu0 0.0
    %141 = vmatpush1.msra.mxu0 0.0
    %142 = vmatprep.subr.mxu0 0.0
    %143 = vmatpush1.msra.mxu0 0.0
    %144 = vmatprep.subr.mxu0 0.0
    %145 = vmatpush1.msra.mxu0 0.0
    %146 = vmatprep.subr.mxu0 0.0
    %147 = vmatpush1.msra.mxu0 0.0
    %148 = vmatprep.subr.mxu0 0.0
    %149 = vmatpush1.msra.mxu0 0.0
    %150 = vmatprep.subr.mxu0 0.0
    %151 = vmatpush1.msra.mxu0 0.0
    %152 = vmatprep.subr.mxu0 0.0
    %153 = vmatpush1.msra.mxu0 0.0
    %154 = vmatprep.subr.mxu0 0.0
    %155 = vmatpush1.msra.mxu0 0.0
    %156 = vmatprep.subr.mxu0 0.0
    %157 = vmatpush1.msra.mxu0 0.0
    %158 = vmatprep.subr.mxu0 0.0
    %159 = vmatpush1.msra.mxu0 0.0
    %160 = vmatprep.subr.mxu0 0.0
    %161 = vmatpush1.msra.mxu0 0.0
    %162 = vmatprep.subr.mxu0 0.0
    %163 = vmatpush1.msra.mxu0 0.0
    %164 = vmatprep.subr.mxu0 0.0
    %165 = vmatpush1.msra.mxu0 0.0
    %166 = vmatprep.subr.mxu0 0.0
    %167 = vmatpush1.msra.mxu0 0.0
    %168 = vmatprep.subr.mxu0 0.0
    %169 = vmatpush1.msra.mxu0 0.0
    %170 = vmatprep.subr.mxu0 0.0
    %171 = vmatpush1.msra.mxu0 0.0
    %172 = vmatprep.subr.mxu0 0.0
    %173 = vmatpush1.msra.mxu0 0.0
    %174 = vmatprep.subr.mxu0 0.0
    %175 = vmatpush1.msra.mxu0 0.0
    %176 = vmatprep.subr.mxu0 0.0
    %177 = vmatpush1.msra.mxu0 0.0
    %178 = vmatprep.subr.mxu0 0.0
    %179 = vmatpush1.msra.mxu0 0.0
    %180 = vmatprep.subr.mxu0 0.0
    %181 = vmatpush1.msra.mxu0 0.0
    %182 = vmatprep.subr.mxu0 0.0
    %183 = vmatpush1.msra.mxu0 0.0
    %184 = vmatprep.subr.mxu0 0.0
    %185 = vmatpush1.msra.mxu0 0.0
    %186 = vmatprep.subr.mxu0 0.0
    %187 = vmatpush1.msra.mxu0 0.0
    %188 = vmatprep.subr.mxu0 0.0
    %189 = vmatpush1.msra.mxu0 0.0
    %190 = vmatprep.subr.mxu0 0.0
    %191 = vmatpush1.msra.mxu0 0.0
    %192 = vmatprep.subr.mxu0 0.0
    %193 = vmatpush1.msra.mxu0 0.0
    %194 = vmatprep.subr.mxu0 0.0
    %195 = vmatpush1.msra.mxu0 0.0
    %196 = vmatprep.subr.mxu0 0.0
    %197 = vmatpush1.msra.mxu0 0.0
    %198 = vmatprep.subr.mxu0 0.0
    %199 = vmatpush1.msra.mxu0 0.0
    %200 = vmatprep.mubr.f32.mxu0 0.0
    %201 = vmatmul.mubr.f32.gmra.mrb[0].mxu0 %v131
    %v202 = vpop.f32.mrb[0].mxu0
    %v203 = vadd.f32 0.0, %v202
    %v204 = vpop.f32.mrb[0].mxu0
    %205 = vmatprep.mubr.f32.mxu0 0.0
    %206 = vmatmul.mubr.f32.gmra.mrb[0].mxu0 %v134
    %v207 = vpop.f32.mrb[0].mxu0
    %v208 = vadd.f32 0.0, %v207
    %v209 = vpop.f32.mrb[0].mxu0
    %210 = vdwg.mxu0
    %v211 = vsel %vm48, %v40, 0.0
    %212 = vadd.xlane.f32.xlu0 %v211
    %v213 = vpop.xlane.xlu0 %212
    %v214 = vsel %vm48, %v41, 0.0
    %215 = vadd.xlane.f32.xlu0 %v214
    %v216 = vpop.xlane.xlu0 %215
    %v217 = vsel %vm48, %v42, 0.0
    %218 = vadd.xlane.f32.xlu0 %v217
    %v219 = vpop.xlane.xlu0 %218
    %v220 = vsel %vm48, %v43, 0.0
    %221 = vadd.xlane.f32.xlu0 %v220
    %v222 = vpop.xlane.xlu0 %221
    %vm223 = vcmp.eq.f32.partialorder %v213, 0.0
    %vm224 = vcmp.eq.f32.partialorder %v216, 0.0
    %vm225 = vcmp.eq.f32.partialorder %v219, 0.0
    %vm226 = vcmp.eq.f32.partialorder %v222, 0.0
    %v227 = vrcp.pop %v213
    %v228 = vmul.f32 1.0, %v227
    %v229 = vrcp.pop %v216
    %v230 = vmul.f32 1.0, %v229
    %v231 = vrcp.pop %v219
    %v232 = vmul.f32 1.0, %v231
    %v233 = vrcp.pop %v222
    %v234 = vmul.f32 1.0, %v233
    %v235 = vsel %vm223, 0.0, %v228
    %v236 = vsel %vm224, 0.0, %v230
    %v237 = vsel %vm225, 0.0, %v232
    %v238 = vsel %vm226, 0.0, %v234
    %v239 = vmul.f32 %v122, %v235
    %v240 = vmul.f32 %v127, %v236
    %v241 = vmul.f32 %v203, %v237
    %v242 = vmul.f32 %v208, %v238
    %vm243 = vcmask 261120
    %244 = vst.msk [vmem:[#allocation7] sm:$0xff] %vm243, %v239
    %245 = vst.msk [vmem:[#allocation7 + $0x8] sm:$0xff] %vm243, %v240
    %246 = vst.msk [vmem:[#allocation7 + $0x10] sm:$0xff] %vm243, %v241
    %247 = vst.msk [vmem:[#allocation7 + $0x18] sm:$0xff] %vm243, %v242
    // Predicated region
    $region18: #{tpu_custom_call.1} parent=1 // pred_check
      _
    $region19: #{tpu_custom_call.1} parent=1 // pred_check_branch
      %249 = sbr.rel (0) target = $region21
    $region20: #{tpu_custom_call.1} parent=1 // pred_region
      %s251 = ssub.s32 512, 512
      %252 = vsyncadd [#allocation4], %s251
      %s253 = sshll.u32 [#allocation7], 4
      %s254 = int_to_ptr.vmem [resolvable:$true] %s253
      %259 = dma.vmem_to_hbm [thread:$0]  %s254, 512, %s2, [#allocation4], 128, 128, 8
    $region21: #{tpu_custom_call.1} parent=1 // pred_fallthru
      _
    // Predicated region
    $region22: #{tpu_custom_call.1} parent=1 // pred_check
      _
    $region23: #{tpu_custom_call.1} parent=1 // pred_check_branch
      %261 = sbr.rel (0) target = $region25
    $region24: #{tpu_custom_call.1} parent=1 // pred_region
      %262 = dma.done [#allocation4], 512
    $region25: #{tpu_custom_call.1} parent=1 // pred_fallthru
      _
    %263 = vsyncpa [#allocation3], 1
    %264 = vsyncpa [#allocation6], 1
    %265 = vsyncpa [#allocation4], 1

</llo_original>
